<compile_context>
chip_gen: v6e
topology: v6e:2x2x1
jax: 0.10.0
libtpu: 0.0.40
codegen_flags: <defaults>
</compile_context>

<pallas_src>
import functools

import jax
import jax.numpy as jnp
from jax.experimental import pallas as pl
from jax.experimental.pallas import tpu as pltpu

H1, H2, H3 = 64, 32, 16     # hidden layer widths from the PyTorch module
LANES = 128                 # TPU lane width / padded feature width


def _round_up(x, m):
    return (x + m - 1) // m * m


def _cdiv(a, b):
    return (a + b - 1) // b


def _slab_offsets(n_in):
    """Row offsets of each parameter segment inside the packed slab."""
    w1_rows = _round_up(n_in, 8)
    o_w1 = 0
    o_w2 = o_w1 + w1_rows      # W2 padded to [128, 128]
    o_w3 = o_w2 + LANES        # W3 padded to [128, 128]
    o_w4 = o_w3 + LANES        # W4 padded to [128, 128]
    o_b = o_w4 + LANES         # 4 bias rows (+ padding to 8 rows)
    total = o_b + 8
    return o_w1, o_w2, o_w3, o_w4, o_b, total


def pack_params(params, n_in, n_out):
    """Pack all weights/biases into one zero-padded [total, 128] f32 slab."""
    assert n_in <= LANES and n_out <= LANES
    o_w1, o_w2, o_w3, o_w4, o_b, total = _slab_offsets(n_in)
    slab = jnp.zeros((total, LANES), jnp.float32)
    slab = slab.at[o_w1:o_w1 + n_in, :H1].set(params["w1"])
    slab = slab.at[o_w2:o_w2 + H1, :H2].set(params["w2"])
    slab = slab.at[o_w3:o_w3 + H2, :H3].set(params["w3"])
    slab = slab.at[o_w4:o_w4 + H3, :n_out].set(params["w4"])
    slab = slab.at[o_b + 0, :H1].set(params["b1"].reshape(-1))
    slab = slab.at[o_b + 1, :H2].set(params["b2"].reshape(-1))
    slab = slab.at[o_b + 2, :H3].set(params["b3"].reshape(-1))
    slab = slab.at[o_b + 3, :n_out].set(params["b4"].reshape(-1))
    return slab


def _critic_kernel(x_ref, slab_ref, out_ref, *, n_in, out_w):
    o_w1, o_w2, o_w3, o_w4, o_b, _ = _slab_offsets(n_in)
    n_in_pad = _round_up(n_in, 8)

    x = x_ref[...]                               # [TB, n_in_pad] (padding = 0)
    w1 = slab_ref[o_w1:o_w1 + n_in_pad, :]       # [8, 128]   aligned full tile
    w2 = slab_ref[o_w2:o_w2 + LANES, :]          # [128, 128] (zero padded)
    w3 = slab_ref[o_w3:o_w3 + LANES, :]          # [128, 128]
    w4 = slab_ref[o_w4:o_w4 + LANES, :]          # [128, 128]
    b1 = slab_ref[o_b + 0:o_b + 1, :]            # [1, 128]
    b2 = slab_ref[o_b + 1:o_b + 2, :]
    b3 = slab_ref[o_b + 2:o_b + 3, :]
    b4 = slab_ref[o_b + 3:o_b + 4, :]

    # Zero padding of weights/biases keeps the padded lanes exactly zero, so
    # the chained 128-wide matmuls are numerically identical to the reference.
    h = jnp.maximum(jnp.dot(x, w1, preferred_element_type=jnp.float32) + b1, 0.0)
    h = jnp.maximum(jnp.dot(h, w2, preferred_element_type=jnp.float32) + b2, 0.0)
    h = jnp.maximum(jnp.dot(h, w3, preferred_element_type=jnp.float32) + b3, 0.0)
    out = jnp.dot(h, w4, preferred_element_type=jnp.float32) + b4    # [TB, 128]
    # Store only the narrow output block (value lives in column 0).
    out_ref[...] = out[:, :out_w].astype(out_ref.dtype)


def _jax_fast_path(x_pad, slab, n_in, n_out):
    """Small-batch path: same math as the kernel, plain XLA fused dots."""
    o_w1, o_w2, o_w3, o_w4, o_b, _ = _slab_offsets(n_in)
    n_in_pad = _round_up(n_in, 8)
    h = jnp.maximum(x_pad @ slab[o_w1:o_w1 + n_in_pad] + slab[o_b + 0], 0.0)
    h = jnp.maximum(h @ slab[o_w2:o_w2 + LANES] + slab[o_b + 1], 0.0)
    h = jnp.maximum(h @ slab[o_w3:o_w3 + LANES] + slab[o_b + 2], 0.0)
    out = h @ slab[o_w4:o_w4 + LANES] + slab[o_b + 3]
    return out[:, :n_out]


def critic_forward(x, slab, n_out, *, block_b=2048, min_pallas_batch=512,
                   force_pallas=False):
    """x: [B, n_in] f32, slab: packed params from pack_params. -> [B, n_out]."""
    B, n_in = x.shape
    n_in_pad = _round_up(n_in, 8)
    out_w = min(LANES, _round_up(max(n_out, 1), 8))

    # Zero-pad the feature dim so the first matmul is an aligned [TB,8]@[8,128].
    x_pad = jnp.pad(x, ((0, 0), (0, n_in_pad - n_in))) if n_in_pad != n_in else x

    # Small-batch fast path: the Pallas call is pure fixed overhead there.
    if B < min_pallas_batch and not force_pallas:
        return _jax_fast_path(x_pad, slab, n_in, n_out)

    # Tail-padding-aware, balanced tiling (>=2 tiles for the v7x 2-TC split).
    n_tiles = max(2, _cdiv(B, block_b))
    tb = _round_up(_cdiv(B, n_tiles), 8)
    b_pad = n_tiles * tb
    if b_pad != B:
        x_pad = jnp.pad(x_pad, ((0, b_pad - B), (0, 0)))

    flops = 2 * b_pad * (n_in_pad * H1 + H1 * H2 + H2 * H3 + H3 * n_out)
    bytes_accessed = (b_pad * n_in_pad * 4      # x read
                      + slab.size * 4           # weights, fetched once
                      + b_pad * out_w * 4)      # narrow output writeback

    out_pad = pl.pallas_call(
        functools.partial(_critic_kernel, n_in=n_in, out_w=out_w),
        out_shape=jax.ShapeDtypeStruct((b_pad, out_w), jnp.float32),
        grid=(n_tiles,),
        in_specs=[
            pl.BlockSpec((tb, n_in_pad), lambda i: (i, 0)),   # batch-tiled x
            # Constant block index -> Pallas DMAs the slab once for the grid.
            pl.BlockSpec(slab.shape, lambda i: (0, 0)),
        ],
        out_specs=pl.BlockSpec((tb, out_w), lambda i: (i, 0)),  # narrow output
        compiler_params=pltpu.CompilerParams(
            dimension_semantics=("parallel",)),               # megacore split on v7x
        cost_estimate=pl.CostEstimate(flops=flops, transcendentals=0,
                                      bytes_accessed=bytes_accessed),
    )(x_pad, slab)

    return out_pad[:B, :n_out]


def init_params(key, n_in, n_out):
    """PyTorch nn.Linear default init: U(-1/sqrt(fan_in), 1/sqrt(fan_in))."""
    sizes = [(n_in, H1), (H1, H2), (H2, H3), (H3, n_out)]
    params = {}
    keys = jax.random.split(key, 2 * len(sizes))
    for i, (fan_in, fan_out) in enumerate(sizes):
        bound = 1.0 / jnp.sqrt(jnp.float32(fan_in))
        params[f"w{i + 1}"] = jax.random.uniform(
            keys[2 * i], (fan_in, fan_out), minval=-bound, maxval=bound,
            dtype=jnp.float32)
        params[f"b{i + 1}"] = jax.random.uniform(
            keys[2 * i + 1], (1, fan_out), minval=-bound, maxval=bound,
            dtype=jnp.float32)
    return params


def critic_reference(x, params):
    """Pure-JAX reference for correctness check."""
    h = jnp.maximum(x @ params["w1"] + params["b1"], 0.0)
    h = jnp.maximum(h @ params["w2"] + params["b2"], 0.0)
    h = jnp.maximum(h @ params["w3"] + params["b3"], 0.0)
    return h @ params["w4"] + params["b4"]


if __name__ == "__main__":
    key = jax.random.PRNGKey(0)
    k_param, k_x, k_x2 = jax.random.split(key, 3)

    # Pendulum-v0/v1 observation dim = 3, critic value output dim = 1.
    n_in, n_out = 3, 1
    params = init_params(k_param, n_in, n_out)
    slab = pack_params(params, n_in, n_out)

    # Small batch: takes the pure-JAX fast path.
    x_small = jax.random.normal(k_x, (8, n_in), dtype=jnp.float32)
    out_small = jax.block_until_ready(critic_forward(x_small, slab, n_out))
    ref_small = critic_reference(x_small, params)
    assert out_small.shape == (8, n_out), out_small.shape
    assert jnp.allclose(out_small, ref_small, atol=1e-5, rtol=1e-5)

    # Same small batch forced through the Pallas kernel (2 tiles of 8 rows).
    out_small_pl = jax.block_until_ready(
        critic_forward(x_small, slab, n_out, force_pallas=True))
    assert out_small_pl.shape == (8, n_out), out_small_pl.shape
    assert jnp.allclose(out_small_pl, ref_small, atol=1e-5, rtol=1e-5)

    # Larger, non-multiple-of-tile batch through the Pallas path: 2 balanced
    # tiles of 304 rows (only 8 padded rows), exercises the parallel grid,
    # tail padding, and the narrow-output store.
    x_big = jax.random.normal(k_x2, (600, n_in), dtype=jnp.float32)
    out_big = jax.block_until_ready(critic_forward(x_big, slab, n_out))
    ref_big = critic_reference(x_big, params)
    assert out_big.shape == (600, n_out), out_big.shape
    assert jnp.allclose(out_big, ref_big, atol=1e-4, rtol=1e-4)

    print("KERNEL_OK")
</pallas_src>

<mosaic_0001>
module attributes {stable_mosaic.version = 11 : i64} {
  func.func @_critic_kernel(%arg0: i32, %arg1: memref<8x8xf32, #tpu.memory_space<vmem>>, %arg2: memref<400x128xf32, #tpu.memory_space<vmem>>, %arg3: memref<8x8xf32, #tpu.memory_space<vmem>>) attributes {dimension_semantics = [#tpu.dimension_semantics<parallel>], iteration_bounds = array<i64: 2>, scalar_prefetch = 0 : i64, scratch_operands = 0 : i64, tpu.core_type = #tpu.core_type<tc>, window_params = [{transform_indices = @transform_0, window_bounds = array<i64: 8, 8>}, {pipeline_mode = #tpu.pipeline_mode<synchronous>, transform_indices = @transform_1, window_bounds = array<i64: 400, 128>}, {transform_indices = @transform_2, window_bounds = array<i64: 8, 8>}]} {
    %c0 = arith.constant 0 : index
    %c0_0 = arith.constant 0 : index
    %0 = vector.load %arg1[%c0, %c0_0] : memref<8x8xf32, #tpu.memory_space<vmem>>, vector<8x8xf32>
    %c0_1 = arith.constant 0 : index
    %c0_2 = arith.constant 0 : index
    %1 = vector.load %arg2[%c0_1, %c0_2] : memref<400x128xf32, #tpu.memory_space<vmem>>, vector<8x128xf32>
    %c8 = arith.constant 8 : index
    %c0_3 = arith.constant 0 : index
    %2 = vector.load %arg2[%c8, %c0_3] : memref<400x128xf32, #tpu.memory_space<vmem>>, vector<128x128xf32>
    %c136 = arith.constant 136 : index
    %c0_4 = arith.constant 0 : index
    %3 = vector.load %arg2[%c136, %c0_4] : memref<400x128xf32, #tpu.memory_space<vmem>>, vector<128x128xf32>
    %c264 = arith.constant 264 : index
    %c0_5 = arith.constant 0 : index
    %4 = vector.load %arg2[%c264, %c0_5] : memref<400x128xf32, #tpu.memory_space<vmem>>, vector<128x128xf32>
    %c392 = arith.constant 392 : index
    %c0_6 = arith.constant 0 : index
    %5 = vector.load %arg2[%c392, %c0_6] : memref<400x128xf32, #tpu.memory_space<vmem>>, vector<1x128xf32>
    %c393 = arith.constant 393 : index
    %c0_7 = arith.constant 0 : index
    %6 = vector.load %arg2[%c393, %c0_7] : memref<400x128xf32, #tpu.memory_space<vmem>>, vector<1x128xf32>
    %c394 = arith.constant 394 : index
    %c0_8 = arith.constant 0 : index
    %7 = vector.load %arg2[%c394, %c0_8] : memref<400x128xf32, #tpu.memory_space<vmem>>, vector<1x128xf32>
    %c395 = arith.constant 395 : index
    %c0_9 = arith.constant 0 : index
    %8 = vector.load %arg2[%c395, %c0_9] : memref<400x128xf32, #tpu.memory_space<vmem>>, vector<1x128xf32>
    %cst = arith.constant dense<0.000000e+00> : vector<8x128xf32>
    %9 = tpu.matmul %0, %1, %cst {dimension_numbers = #tpu.dot_dimension_numbers<[1], [0], [0], [1], [0, 0, 1, 1], [], []>} : vector<8x8xf32>, vector<8x128xf32>, vector<8x128xf32> -> vector<8x128xf32>
    %10 = vector.broadcast %5 : vector<1x128xf32> to vector<8x128xf32>
    %11 = arith.addf %9, %10 : vector<8x128xf32>
    %cst_10 = arith.constant 0.000000e+00 : f32
    %12 = vector.broadcast %cst_10 : f32 to vector<8x128xf32>
    %13 = arith.maximumf %11, %12 : vector<8x128xf32>
    %cst_11 = arith.constant dense<0.000000e+00> : vector<8x128xf32>
    %14 = tpu.matmul %13, %2, %cst_11 {dimension_numbers = #tpu.dot_dimension_numbers<[1], [0], [0], [1], [0, 0, 1, 1], [], []>} : vector<8x128xf32>, vector<128x128xf32>, vector<8x128xf32> -> vector<8x128xf32>
    %15 = vector.broadcast %6 : vector<1x128xf32> to vector<8x128xf32>
    %16 = arith.addf %14, %15 : vector<8x128xf32>
    %cst_12 = arith.constant 0.000000e+00 : f32
    %17 = vector.broadcast %cst_12 : f32 to vector<8x128xf32>
    %18 = arith.maximumf %16, %17 : vector<8x128xf32>
    %cst_13 = arith.constant dense<0.000000e+00> : vector<8x128xf32>
    %19 = tpu.matmul %18, %3, %cst_13 {dimension_numbers = #tpu.dot_dimension_numbers<[1], [0], [0], [1], [0, 0, 1, 1], [], []>} : vector<8x128xf32>, vector<128x128xf32>, vector<8x128xf32> -> vector<8x128xf32>
    %20 = vector.broadcast %7 : vector<1x128xf32> to vector<8x128xf32>
    %21 = arith.addf %19, %20 : vector<8x128xf32>
    %cst_14 = arith.constant 0.000000e+00 : f32
    %22 = vector.broadcast %cst_14 : f32 to vector<8x128xf32>
    %23 = arith.maximumf %21, %22 : vector<8x128xf32>
    %cst_15 = arith.constant dense<0.000000e+00> : vector<8x128xf32>
    %24 = tpu.matmul %23, %4, %cst_15 {dimension_numbers = #tpu.dot_dimension_numbers<[1], [0], [0], [1], [0, 0, 1, 1], [], []>} : vector<8x128xf32>, vector<128x128xf32>, vector<8x128xf32> -> vector<8x128xf32>
    %25 = vector.broadcast %8 : vector<1x128xf32> to vector<8x128xf32>
    %26 = arith.addf %24, %25 : vector<8x128xf32>
    %27 = vector.extract_strided_slice %26 {offsets = [0, 0], sizes = [8, 8], strides = [1, 1]} : vector<8x128xf32> to vector<8x8xf32>
    %c0_16 = arith.constant 0 : index
    %c0_17 = arith.constant 0 : index
    %28 = vector.load %arg3[%c0_16, %c0_17] : memref<8x8xf32, #tpu.memory_space<vmem>>, vector<8x8xf32>
    tpu.vector_store %arg3[%c0_16, %c0_17], %27 {strides = array<i32>} : memref<8x8xf32, #tpu.memory_space<vmem>>, vector<8x8xf32>,
    return
  }
  func.func @transform_0(%arg0: i32) -> (i32, i32) {
    %c0_i32 = arith.constant 0 : i32
    %c0_i32_0 = arith.constant 0 : i32
    return %arg0, %c0_i32 : i32, i32
  }
  func.func @transform_1(%arg0: i32) -> (i32, i32) {
    %c0_i32 = arith.constant 0 : i32
    %c0_i32_0 = arith.constant 0 : i32
    %c0_i32_1 = arith.constant 0 : i32
    return %c0_i32, %c0_i32_0 : i32, i32
  }
  func.func @transform_2(%arg0: i32) -> (i32, i32) {
    %c0_i32 = arith.constant 0 : i32
    %c0_i32_0 = arith.constant 0 : i32
    return %arg0, %c0_i32 : i32, i32
  }
}

</mosaic_0001>

<llo_original>
// kernel: tpu_custom_call.1
$region0: #{tpu_custom_call.1}
  #allocation0 [shape = 'u32[]', space=smem, size = 0x4, offset = 0x4, fixed_abs, tag = 'smem constant byte address 0x4 - core index']
  #allocation1 [shape = 'u32[144,128]{1,0:T(1,128)}', space=vmem, size = 0x12000, scoped, tag = 'internal scratch']
  %s0 = inlined_call_operand.vmem [shape: f32[16,8], index: 0, kind: input, shape index: {}]
  %s1 = inlined_call_operand.hbm [shape: f32[400,128], index: 1, kind: input, shape index: {}]
  %s2 = inlined_call_operand.vmem [shape: f32[16,8], index: 2, kind: output, shape index: {}]
  %s3 = sld [smem:[#allocation0]]
  $region45: #{tpu_custom_call.1} parent=0
    _
  %s5 = ssub.s32 1, %s3
  %s6 = scalar_select 0, %s5, %s3
  $region1: #{tpu_custom_call.1} parent=0
    #allocation2 [shape = 'u8[204800]{0}', space=vmem, size = 0x32000, scoped, tag = 'input window, operand 1, single buffered']
    #allocation3 [shape = 's32[2]{0}', space=sflag, size = 0x8, scoped, tag = 'scoped memory for tpu_custom_call.1']
    %7 = vsyncpa [#allocation3], 0
    loop: start=0, step=1, limit=4
    $region2: #{tpu_custom_call.1} parent=1 // loop_pre_header
      _
    $region3: #{tpu_custom_call.1} parent=1 // loop_header
      %s9 = sphi 0, %s13
      %p10 = scmp.ge.s32.totalorder %s9, 4
      %s19 = sphi 0, %s21
      %s22 = sphi 0, %s19
      %s23 = sphi 0, %s22
      %s39 = sphi 0, %s23
      %s43 = sphi 0, %s43
      %s45 = sphi 0, %s43
      %s46 = sphi 0, %s45
      %s60 = sphi 0, %s46
      %s66 = sphi 0, %s68
      %s69 = sphi 0, %s66
      %s70 = sphi 0, %s69
      %s86 = sphi 0, %s70
    $region4: #{tpu_custom_call.1} parent=1 // loop_header_branch
      %12 = sbr.rel (%p10) target = $region8
    $region5: #{tpu_custom_call.1} parent=1 // loop_body
      %s14 = ssub.s32 %s9, 1
      %s15 = ssub.s32 %s9, 2
      %s16 = sadd.s32 %s9, 1
      %s17 = ssub.s32 %s9, %s16
      %p18 = scmp.eq.s32.totalorder %s17, 0
      %s20 = sadd.s32 %s19, 1
      %s21 = scalar_select %p18, %s19, %s20
      %p24 = pneg %p18
      %p25 = scmp.eq.s32.totalorder %s9, 1
      %p26 = por %p24, %p25
      %p27 = scmp.ne.s32.totalorder %s19, %s22
      %p28 = scmp.eq.s32.totalorder %s9, 0
      %p29 = por %p27, %p28
      %p30 = scmp.ne.s32.totalorder %s19, %s22
      %p31 = scmp.eq.s32.totalorder %s14, 1
      %p32 = por %p30, %p31
      %p33 = scmp.ne.s32.totalorder %s22, %s23
      %p34 = scmp.eq.s32.totalorder %s14, 0
      %p35 = por %p33, %p34
      %p36 = scmp.ne.s32.totalorder %s22, %s23
      %p37 = scmp.eq.s32.totalorder %s15, 1
      %p38 = por %p36, %p37
      %p40 = scmp.ne.s32.totalorder %s23, %s39
      %p41 = scmp.eq.s32.totalorder %s15, 0
      %p42 = por %p40, %p41
      %s44 = sadd.s32 %s43, 1
      %p47 = scmp.eq.s32.totalorder %s9, 1
      %p48 = scmp.ne.s32.totalorder %s43, %s45
      %p49 = scmp.eq.s32.totalorder %s9, 0
      %p50 = por %p48, %p49
      %p51 = scmp.ne.s32.totalorder %s43, %s45
      %p52 = scmp.eq.s32.totalorder %s14, 1
      %p53 = por %p51, %p52
      %p54 = scmp.ne.s32.totalorder %s45, %s46
      %p55 = scmp.eq.s32.totalorder %s14, 0
      %p56 = por %p54, %p55
      %p57 = scmp.ne.s32.totalorder %s45, %s46
      %p58 = scmp.eq.s32.totalorder %s15, 1
      %p59 = por %p57, %p58
      %p61 = scmp.ne.s32.totalorder %s46, %s60
      %p62 = scmp.eq.s32.totalorder %s15, 0
      %p63 = por %p61, %p62
      %s64 = ssub.s32 %s9, %s16
      %p65 = scmp.eq.s32.totalorder %s64, 0
      %s67 = sadd.s32 %s66, 1
      %s68 = scalar_select %p65, %s66, %s67
      %p71 = pneg %p65
      %p72 = scmp.eq.s32.totalorder %s9, 1
      %p73 = por %p71, %p72
      %p74 = scmp.ne.s32.totalorder %s66, %s69
      %p75 = scmp.eq.s32.totalorder %s9, 0
      %p76 = por %p74, %p75
      %p77 = scmp.ne.s32.totalorder %s66, %s69
      %p78 = scmp.eq.s32.totalorder %s14, 1
      %p79 = por %p77, %p78
      %p80 = scmp.ne.s32.totalorder %s69, %s70
      %p81 = scmp.eq.s32.totalorder %s14, 0
      %p82 = por %p80, %p81
      %p83 = scmp.ne.s32.totalorder %s69, %s70
      %p84 = scmp.eq.s32.totalorder %s15, 1
      %p85 = por %p83, %p84
      %p87 = scmp.ne.s32.totalorder %s70, %s86
      %p88 = scmp.eq.s32.totalorder %s15, 0
      %p89 = por %p87, %p88
      %p90 = scmp.le.s32.totalorder 1, %s9
      %p91 = scmp.lt.s32.totalorder %s9, 3
      %p92 = pnand %p90, %p91
      %p93 = pneg %p92
      // Predicated region
      $region9: #{tpu_custom_call.1} parent=5 // pred_check
        _
      $region10: #{tpu_custom_call.1} parent=5 // pred_check_branch
        %95 = sbr.rel (%p92) target = $region12
      $region11: #{tpu_custom_call.1} parent=5 // pred_region
        %s96 = ssub.s32 %s9, 1
        // Predicated region
        $region13: #{tpu_custom_call.1} parent=11 // pred_check
          %p97 = pneg %p56
        $region14: #{tpu_custom_call.1} parent=11 // pred_check_branch
          %99 = sbr.rel (%p97) target = $region16
        $region15: #{tpu_custom_call.1} parent=11 // pred_region
          %s101 = ssub.s32 6400, 6400
          %102 = vsyncadd [#allocation3], %s101
          %s103 = sshll.u32 [#allocation2], 4
          %s104 = int_to_ptr.vmem [resolvable:$true] %s103
          %109 = dma.hbm_to_vmem [thread:$0]  %s1, 6400, %s104, [#allocation3], 128, 128, 8
        $region16: #{tpu_custom_call.1} parent=11 // pred_fallthru
          _
      $region12: #{tpu_custom_call.1} parent=5 // pred_fallthru
        _
      %p110 = scmp.lt.s32.totalorder %s9, 2
      // Predicated region
      $region17: #{tpu_custom_call.1} parent=5 // pred_check
        %p111 = pneg %p110
      $region18: #{tpu_custom_call.1} parent=5 // pred_check_branch
        %113 = sbr.rel (%p111) target = $region20
      $region19: #{tpu_custom_call.1} parent=5 // pred_region
        // Predicated region
        $region21: #{tpu_custom_call.1} parent=19 // pred_check
          %p114 = pneg %p29
        $region22: #{tpu_custom_call.1} parent=19 // pred_check_branch
          %116 = sbr.rel (%p114) target = $region24
        $region23: #{tpu_custom_call.1} parent=19 // pred_region
          %p117 = scmp.lt.s32.totalorder %s9, 1
          %s118 = scalar_select %p117, %s9, 1
          %s119 = smul.addr %s118, 8
          %s120 = scalar_lea.vmem %s0, %s119
        $region24: #{tpu_custom_call.1} parent=19 // pred_fallthru
          _
      $region20: #{tpu_custom_call.1} parent=5 // pred_fallthru
        _
      %p121 = scmp.le.s32.totalorder 1, %s9
      %p122 = scmp.lt.s32.totalorder %s9, 3
      %p123 = pnand %p121, %p122
      %p124 = pneg %p123
      // Predicated region
      $region25: #{tpu_custom_call.1} parent=5 // pred_check
        _
      $region26: #{tpu_custom_call.1} parent=5 // pred_check_branch
        %126 = sbr.rel (%p123) target = $region28
      $region27: #{tpu_custom_call.1} parent=5 // pred_region
        %s127 = ssub.s32 %s9, 1
        // Predicated region
        $region29: #{tpu_custom_call.1} parent=27 // pred_check
          %p128 = pneg %p56
        $region30: #{tpu_custom_call.1} parent=27 // pred_check_branch
          %130 = sbr.rel (%p128) target = $region32
        $region31: #{tpu_custom_call.1} parent=27 // pred_region
          %131 = dma.done [#allocation3], 6400
        $region32: #{tpu_custom_call.1} parent=27 // pred_fallthru
          _
        %p132 = scmp.lt.s32.totalorder %s14, 1
        %s133 = scalar_select %p132, %s14, 1
        %s134 = smul.addr %s133, 8
        %s135 = scalar_lea.vmem %s0, %s134
        %p136 = pneg %p35
        %p137 = pneg %p32
        %p138 = pneg %p56
        %p139 = pneg %p53
        %p140 = pneg %p82
        %p141 = pneg %p79
        %p142 = scmp.lt.s32.totalorder %s14, 1
        %s143 = scalar_select %p142, %s14, 1
        %s144 = smul.addr %s143, 8
        %s145 = scalar_lea.vmem %s2, %s144
        %p146 = scmp.lt.s32.totalorder %s14, 1
        %s147 = scalar_select %p146, %s14, 1
        %s148 = smul.addr %s147, 8
        %s149 = scalar_lea.vmem %s0, %s148
        %p150 = scmp.lt.s32.totalorder %s14, 1
        %s151 = scalar_select %p150, %s14, 1
        %s152 = smul.addr %s151, 8
        %s153 = scalar_lea.vmem %s2, %s152
        %v154 = vld [vmem:[%s149] sm:$0xff]
        %v155 = vld [vmem:[#allocation2] sm:$0xff]
        %v156 = vld [vmem:[#allocation2 + $0x8] sm:$0xff]
        %v157 = vld [vmem:[#allocation2 + $0x10] sm:$0xff]
        %v158 = vld [vmem:[#allocation2 + $0x18] sm:$0xff]
        %v159 = vld [vmem:[#allocation2 + $0x20] sm:$0xff]
        %v160 = vld [vmem:[#allocation2 + $0x28] sm:$0xff]
        %v161 = vld [vmem:[#allocation2 + $0x30] sm:$0xff]
        %v162 = vld [vmem:[#allocation2 + $0x38] sm:$0xff]
        %v163 = vld [vmem:[#allocation2 + $0x40] sm:$0xff]
        %v164 = vld [vmem:[#allocation2 + $0x48] sm:$0xff]
        %v165 = vld [vmem:[#allocation2 + $0x50] sm:$0xff]
        %v166 = vld [vmem:[#allocation2 + $0x58] sm:$0xff]
        %v167 = vld [vmem:[#allocation2 + $0x60] sm:$0xff]
        %v168 = vld [vmem:[#allocation2 + $0x68] sm:$0xff]
        %v169 = vld [vmem:[#allocation2 + $0x70] sm:$0xff]
        %v170 = vld [vmem:[#allocation2 + $0x78] sm:$0xff]
        %v171 = vld [vmem:[#allocation2 + $0x80] sm:$0xff]
        %v172 = vld [vmem:[#allocation2 + $0x88] sm:$0xff]
        %v173 = vld [vmem:[#allocation2 + $0x90] sm:$0xff]
        %v174 = vld [vmem:[#allocation2 + $0x98] sm:$0xff]
        %v175 = vld [vmem:[#allocation2 + $0xa0] sm:$0xff]
        %v176 = vld [vmem:[#allocation2 + $0xa8] sm:$0xff]
        %v177 = vld [vmem:[#allocation2 + $0xb0] sm:$0xff]
        %v178 = vld [vmem:[#allocation2 + $0xb8] sm:$0xff]
        %v179 = vld [vmem:[#allocation2 + $0xc0] sm:$0xff]
        %v180 = vld [vmem:[#allocation2 + $0xc8] sm:$0xff]
        %v181 = vld [vmem:[#allocation2 + $0xd0] sm:$0xff]
        %v182 = vld [vmem:[#allocation2 + $0xd8] sm:$0xff]
        %v183 = vld [vmem:[#allocation2 + $0xe0] sm:$0xff]
        %v184 = vld [vmem:[#allocation2 + $0xe8] sm:$0xff]
        %v185 = vld [vmem:[#allocation2 + $0xf0] sm:$0xff]
        %v186 = vld [vmem:[#allocation2 + $0xf8] sm:$0xff]
        %v187 = vld [vmem:[#allocation2 + $0x100] sm:$0xff]
        %v188 = vld [vmem:[#allocation2 + $0x108] sm:$0xff]
        %v189 = vld [vmem:[#allocation2 + $0x110] sm:$0xff]
        %v190 = vld [vmem:[#allocation2 + $0x118] sm:$0xff]
        %v191 = vld [vmem:[#allocation2 + $0x120] sm:$0xff]
        %v192 = vld [vmem:[#allocation2 + $0x128] sm:$0xff]
        %v193 = vld [vmem:[#allocation2 + $0x130] sm:$0xff]
        %v194 = vld [vmem:[#allocation2 + $0x138] sm:$0xff]
        %v195 = vld [vmem:[#allocation2 + $0x140] sm:$0xff]
        %v196 = vld [vmem:[#allocation2 + $0x148] sm:$0xff]
        %v197 = vld [vmem:[#allocation2 + $0x150] sm:$0xff]
        %v198 = vld [vmem:[#allocation2 + $0x158] sm:$0xff]
        %v199 = vld [vmem:[#allocation2 + $0x160] sm:$0xff]
        %v200 = vld [vmem:[#allocation2 + $0x168] sm:$0xff]
        %v201 = vld [vmem:[#allocation2 + $0x170] sm:$0xff]
        %v202 = vld [vmem:[#allocation2 + $0x178] sm:$0xff]
        %v203 = vld [vmem:[#allocation2 + $0x180] sm:$0xff]
        %v204 = vld [vmem:[#allocation2 + $0x188] sm:$0x1]
        %v205 = vld [vmem:[#allocation2 + $0x189] sm:$0x1]
        %v206 = vld [vmem:[#allocation2 + $0x18a] sm:$0x1]
        %v207 = vld [vmem:[#allocation2 + $0x18b] sm:$0x1]
        %v208 = vlaneseq
        %v209 = vshrl.u32 %v208, 7
        %v210 = vsub.s32 0, %v209
        %v211 = vrot.slane %v204, %v210
        %vm212 = vcmask 64512
        %v214 = vsel %vm212, %v154, 0
        %216 = vmatprep.subr.mxu0 0.0
        %217 = vmatpush1.msra.mxu0 0.0
        %218 = vmatprep.subr.mxu0 0.0
        %219 = vmatpush1.msra.mxu0 0.0
        %220 = vmatprep.subr.mxu0 0.0
        %221 = vmatpush1.msra.mxu0 0.0
        %222 = vmatprep.subr.mxu0 0.0
        %223 = vmatpush1.msra.mxu0 0.0
        %224 = vmatprep.subr.mxu0 0.0
        %225 = vmatpush1.msra.mxu0 0.0
        %226 = vmatprep.subr.mxu0 0.0
        %227 = vmatpush1.msra.mxu0 0.0
        %228 = vmatprep.subr.mxu0 0.0
        %229 = vmatpush1.msra.mxu0 0.0
        %230 = vmatprep.subr.mxu0 0.0
        %231 = vmatpush1.msra.mxu0 0.0
        %232 = vmatprep.subr.mxu0 0.0
        %233 = vmatpush1.msra.mxu0 0.0
        %234 = vmatprep.subr.mxu0 0.0
        %235 = vmatpush1.msra.mxu0 0.0
        %236 = vmatprep.subr.mxu0 0.0
        %237 = vmatpush1.msra.mxu0 0.0
        %238 = vmatprep.subr.mxu0 0.0
        %239 = vmatpush1.msra.mxu0 0.0
        %240 = vmatprep.subr.mxu0 0.0
        %241 = vmatpush1.msra.mxu0 0.0
        %242 = vmatprep.subr.mxu0 0.0
        %243 = vmatpush1.msra.mxu0 0.0
        %244 = vmatprep.subr.mxu0 0.0
        %245 = vmatpush1.msra.mxu0 0.0
        %246 = vmatprep.subr.mxu0 0.0
        %247 = vmatpush1.msra.mxu0 %v155
        %248 = vmatprep.subr.mxu0 0.0
        %249 = vmatpush2.msra.mxu0 0.0
        %250 = vmatprep.subr.mxu0 0.0
        %251 = vmatpush2.msra.mxu0 0.0
        %252 = vmatprep.subr.mxu0 0.0
        %253 = vmatpush2.msra.mxu0 0.0
        %254 = vmatprep.subr.mxu0 0.0
        %255 = vmatpush2.msra.mxu0 0.0
        %256 = vmatprep.subr.mxu0 0.0
        %257 = vmatpush2.msra.mxu0 0.0
        %258 = vmatprep.subr.mxu0 0.0
        %259 = vmatpush2.msra.mxu0 0.0
        %260 = vmatprep.subr.mxu0 0.0
        %261 = vmatpush2.msra.mxu0 0.0
        %262 = vmatprep.subr.mxu0 0.0
        %263 = vmatpush2.msra.mxu0 0.0
        %264 = vmatprep.subr.mxu0 0.0
        %265 = vmatpush2.msra.mxu0 0.0
        %266 = vmatprep.subr.mxu0 0.0
        %267 = vmatpush2.msra.mxu0 0.0
        %268 = vmatprep.subr.mxu0 0.0
        %269 = vmatpush2.msra.mxu0 0.0
        %270 = vmatprep.subr.mxu0 0.0
        %271 = vmatpush2.msra.mxu0 0.0
        %272 = vmatprep.subr.mxu0 0.0
        %273 = vmatpush2.msra.mxu0 0.0
        %274 = vmatprep.subr.mxu0 0.0
        %275 = vmatpush2.msra.mxu0 0.0
        %276 = vmatprep.subr.mxu0 0.0
        %277 = vmatpush2.msra.mxu0 0.0
        %278 = vmatprep.subr.mxu0 0.0
        %279 = vmatpush2.msra.mxu0 0.0
        %280 = vmatprep.mubr.f32.mxu0 0.0
        %281 = vmatmul.mubr.f32.gmra.mxu0 %v214
        %v282 = vpop.f32.mrf.mxu0
        %v283 = vadd.f32 %v211, %v282
        %v284 = vpop.f32.mrf.mxu0
        %285 = vdwg.mxu0
        %v286 = vmax.f32 %v283, 0.0
        %v287 = vlaneseq
        %v288 = vshrl.u32 %v287, 7
        %v289 = vsub.s32 0, %v288
        %v290 = vrot.slane %v205, %v289
        %291 = vmatprep.subr.mxu0 0.0
        %292 = vmatpush1.msra.mxu0 %v171
        %293 = vmatprep.subr.mxu0 0.0
        %294 = vmatpush1.msra.mxu0 %v170
        %295 = vmatprep.subr.mxu0 0.0
        %296 = vmatpush1.msra.mxu0 %v169
        %297 = vmatprep.subr.mxu0 0.0
        %298 = vmatpush1.msra.mxu0 %v168
        %299 = vmatprep.subr.mxu0 0.0
        %300 = vmatpush1.msra.mxu0 %v167
        %301 = vmatprep.subr.mxu0 0.0
        %302 = vmatpush1.msra.mxu0 %v166
        %303 = vmatprep.subr.mxu0 0.0
        %304 = vmatpush1.msra.mxu0 %v165
        %305 = vmatprep.subr.mxu0 0.0
        %306 = vmatpush1.msra.mxu0 %v164
        %307 = vmatprep.subr.mxu0 0.0
        %308 = vmatpush1.msra.mxu0 %v163
        %309 = vmatprep.subr.mxu0 0.0
        %310 = vmatpush1.msra.mxu0 %v162
        %311 = vmatprep.subr.mxu0 0.0
        %312 = vmatpush1.msra.mxu0 %v161
        %313 = vmatprep.subr.mxu0 0.0
        %314 = vmatpush1.msra.mxu0 %v160
        %315 = vmatprep.subr.mxu0 0.0
        %316 = vmatpush1.msra.mxu0 %v159
        %317 = vmatprep.subr.mxu0 0.0
        %318 = vmatpush1.msra.mxu0 %v158
        %319 = vmatprep.subr.mxu0 0.0
        %320 = vmatpush1.msra.mxu0 %v157
        %321 = vmatprep.subr.mxu0 0.0
        %322 = vmatpush1.msra.mxu0 %v156
        %323 = vmatprep.subr.mxu0 0.0
        %324 = vmatpush2.msra.mxu0 0.0
        %325 = vmatprep.subr.mxu0 0.0
        %326 = vmatpush2.msra.mxu0 0.0
        %327 = vmatprep.subr.mxu0 0.0
        %328 = vmatpush2.msra.mxu0 0.0
        %329 = vmatprep.subr.mxu0 0.0
        %330 = vmatpush2.msra.mxu0 0.0
        %331 = vmatprep.subr.mxu0 0.0
        %332 = vmatpush2.msra.mxu0 0.0
        %333 = vmatprep.subr.mxu0 0.0
        %334 = vmatpush2.msra.mxu0 0.0
        %335 = vmatprep.subr.mxu0 0.0
        %336 = vmatpush2.msra.mxu0 0.0
        %337 = vmatprep.subr.mxu0 0.0
        %338 = vmatpush2.msra.mxu0 0.0
        %339 = vmatprep.subr.mxu0 0.0
        %340 = vmatpush2.msra.mxu0 0.0
        %341 = vmatprep.subr.mxu0 0.0
        %342 = vmatpush2.msra.mxu0 0.0
        %343 = vmatprep.subr.mxu0 0.0
        %344 = vmatpush2.msra.mxu0 0.0
        %345 = vmatprep.subr.mxu0 0.0
        %346 = vmatpush2.msra.mxu0 0.0
        %347 = vmatprep.subr.mxu0 0.0
        %348 = vmatpush2.msra.mxu0 0.0
        %349 = vmatprep.subr.mxu0 0.0
        %350 = vmatpush2.msra.mxu0 0.0
        %351 = vmatprep.subr.mxu0 0.0
        %352 = vmatpush2.msra.mxu0 0.0
        %353 = vmatprep.subr.mxu0 0.0
        %354 = vmatpush2.msra.mxu0 0.0
        %355 = vmatprep.mubr.f32.mxu0 0.0
        %356 = vmatmul.mubr.f32.gmra.mxu0 %v286
        %v357 = vpop.f32.mrf.mxu0
        %v358 = vadd.f32 %v290, %v357
        %v359 = vpop.f32.mrf.mxu0
        %360 = vdwg.mxu0
        %v361 = vmax.f32 %v358, 0.0
        %v362 = vlaneseq
        %v363 = vshrl.u32 %v362, 7
        %v364 = vsub.s32 0, %v363
        %v365 = vrot.slane %v206, %v364
        %366 = vmatprep.subr.mxu0 0.0
        %367 = vmatpush1.msra.mxu0 %v187
        %368 = vmatprep.subr.mxu0 0.0
        %369 = vmatpush1.msra.mxu0 %v186
        %370 = vmatprep.subr.mxu0 0.0
        %371 = vmatpush1.msra.mxu0 %v185
        %372 = vmatprep.subr.mxu0 0.0
        %373 = vmatpush1.msra.mxu0 %v184
        %374 = vmatprep.subr.mxu0 0.0
        %375 = vmatpush1.msra.mxu0 %v183
        %376 = vmatprep.subr.mxu0 0.0
        %377 = vmatpush1.msra.mxu0 %v182
        %378 = vmatprep.subr.mxu0 0.0
        %379 = vmatpush1.msra.mxu0 %v181
        %380 = vmatprep.subr.mxu0 0.0
        %381 = vmatpush1.msra.mxu0 %v180
        %382 = vmatprep.subr.mxu0 0.0
        %383 = vmatpush1.msra.mxu0 %v179
        %384 = vmatprep.subr.mxu0 0.0
        %385 = vmatpush1.msra.mxu0 %v178
        %386 = vmatprep.subr.mxu0 0.0
        %387 = vmatpush1.msra.mxu0 %v177
        %388 = vmatprep.subr.mxu0 0.0
        %389 = vmatpush1.msra.mxu0 %v176
        %390 = vmatprep.subr.mxu0 0.0
        %391 = vmatpush1.msra.mxu0 %v175
        %392 = vmatprep.subr.mxu0 0.0
        %393 = vmatpush1.msra.mxu0 %v174
        %394 = vmatprep.subr.mxu0 0.0
        %395 = vmatpush1.msra.mxu0 %v173
        %396 = vmatprep.subr.mxu0 0.0
        %397 = vmatpush1.msra.mxu0 %v172
        %398 = vmatprep.subr.mxu0 0.0
        %399 = vmatpush2.msra.mxu0 0.0
        %400 = vmatprep.subr.mxu0 0.0
        %401 = vmatpush2.msra.mxu0 0.0
        %402 = vmatprep.subr.mxu0 0.0
        %403 = vmatpush2.msra.mxu0 0.0
        %404 = vmatprep.subr.mxu0 0.0
        %405 = vmatpush2.msra.mxu0 0.0
        %406 = vmatprep.subr.mxu0 0.0
        %407 = vmatpush2.msra.mxu0 0.0
        %408 = vmatprep.subr.mxu0 0.0
        %409 = vmatpush2.msra.mxu0 0.0
        %410 = vmatprep.subr.mxu0 0.0
        %411 = vmatpush2.msra.mxu0 0.0
        %412 = vmatprep.subr.mxu0 0.0
        %413 = vmatpush2.msra.mxu0 0.0
        %414 = vmatprep.subr.mxu0 0.0
        %415 = vmatpush2.msra.mxu0 0.0
        %416 = vmatprep.subr.mxu0 0.0
        %417 = vmatpush2.msra.mxu0 0.0
        %418 = vmatprep.subr.mxu0 0.0
        %419 = vmatpush2.msra.mxu0 0.0
        %420 = vmatprep.subr.mxu0 0.0
        %421 = vmatpush2.msra.mxu0 0.0
        %422 = vmatprep.subr.mxu0 0.0
        %423 = vmatpush2.msra.mxu0 0.0
        %424 = vmatprep.subr.mxu0 0.0
        %425 = vmatpush2.msra.mxu0 0.0
        %426 = vmatprep.subr.mxu0 0.0
        %427 = vmatpush2.msra.mxu0 0.0
        %428 = vmatprep.subr.mxu0 0.0
        %429 = vmatpush2.msra.mxu0 0.0
        %430 = vmatprep.mubr.f32.mxu0 0.0
        %431 = vmatmul.mubr.f32.gmra.mxu0 %v361
        %v432 = vpop.f32.mrf.mxu0
        %v433 = vadd.f32 %v365, %v432
        %v434 = vpop.f32.mrf.mxu0
        %435 = vdwg.mxu0
        %v436 = vmax.f32 %v433, 0.0
        %v437 = vlaneseq
        %v438 = vshrl.u32 %v437, 7
        %v439 = vsub.s32 0, %v438
        %v440 = vrot.slane %v207, %v439
        %441 = vmatprep.subr.mxu0 0.0
        %442 = vmatpush1.msra.mxu0 %v203
        %443 = vmatprep.subr.mxu0 0.0
        %444 = vmatpush1.msra.mxu0 %v202
        %445 = vmatprep.subr.mxu0 0.0
        %446 = vmatpush1.msra.mxu0 %v201
        %447 = vmatprep.subr.mxu0 0.0
        %448 = vmatpush1.msra.mxu0 %v200
        %449 = vmatprep.subr.mxu0 0.0
        %450 = vmatpush1.msra.mxu0 %v199
        %451 = vmatprep.subr.mxu0 0.0
        %452 = vmatpush1.msra.mxu0 %v198
        %453 = vmatprep.subr.mxu0 0.0
        %454 = vmatpush1.msra.mxu0 %v197
        %455 = vmatprep.subr.mxu0 0.0
        %456 = vmatpush1.msra.mxu0 %v196
        %457 = vmatprep.subr.mxu0 0.0
        %458 = vmatpush1.msra.mxu0 %v195
        %459 = vmatprep.subr.mxu0 0.0
        %460 = vmatpush1.msra.mxu0 %v194
        %461 = vmatprep.subr.mxu0 0.0
        %462 = vmatpush1.msra.mxu0 %v193
        %463 = vmatprep.subr.mxu0 0.0
        %464 = vmatpush1.msra.mxu0 %v192
        %465 = vmatprep.subr.mxu0 0.0
        %466 = vmatpush1.msra.mxu0 %v191
        %467 = vmatprep.subr.mxu0 0.0
        %468 = vmatpush1.msra.mxu0 %v190
        %469 = vmatprep.subr.mxu0 0.0
        %470 = vmatpush1.msra.mxu0 %v189
        %471 = vmatprep.subr.mxu0 0.0
        %472 = vmatpush1.msra.mxu0 %v188
        %473 = vmatprep.subr.mxu0 0.0
        %474 = vmatpush2.msra.mxu0 0.0
        %475 = vmatprep.subr.mxu0 0.0
        %476 = vmatpush2.msra.mxu0 0.0
        %477 = vmatprep.subr.mxu0 0.0
        %478 = vmatpush2.msra.mxu0 0.0
        %479 = vmatprep.subr.mxu0 0.0
        %480 = vmatpush2.msra.mxu0 0.0
        %481 = vmatprep.subr.mxu0 0.0
        %482 = vmatpush2.msra.mxu0 0.0
        %483 = vmatprep.subr.mxu0 0.0
        %484 = vmatpush2.msra.mxu0 0.0
        %485 = vmatprep.subr.mxu0 0.0
        %486 = vmatpush2.msra.mxu0 0.0
        %487 = vmatprep.subr.mxu0 0.0
        %488 = vmatpush2.msra.mxu0 0.0
        %489 = vmatprep.subr.mxu0 0.0
        %490 = vmatpush2.msra.mxu0 0.0
        %491 = vmatprep.subr.mxu0 0.0
        %492 = vmatpush2.msra.mxu0 0.0
        %493 = vmatprep.subr.mxu0 0.0
        %494 = vmatpush2.msra.mxu0 0.0
        %495 = vmatprep.subr.mxu0 0.0
        %496 = vmatpush2.msra.mxu0 0.0
        %497 = vmatprep.subr.mxu0 0.0
        %498 = vmatpush2.msra.mxu0 0.0
        %499 = vmatprep.subr.mxu0 0.0
        %500 = vmatpush2.msra.mxu0 0.0
        %501 = vmatprep.subr.mxu0 0.0
        %502 = vmatpush2.msra.mxu0 0.0
        %503 = vmatprep.subr.mxu0 0.0
        %504 = vmatpush2.msra.mxu0 0.0
        %505 = vmatprep.mubr.f32.mxu0 0.0
        %506 = vmatmul.mubr.f32.gmra.mxu0 %v436
        %v507 = vpop.f32.mrf.mxu0
        %v508 = vadd.f32 %v440, %v507
        %v509 = vpop.f32.mrf.mxu0
        %510 = vdwg.mxu0
        %511 = vst.msk [vmem:[%s153] sm:$0xff] %vm212, %v508
        %p512 = scmp.lt.s32.totalorder %s14, 1
        %s513 = scalar_select %p512, %s14, 1
        %s514 = smul.addr %s513, 8
        %s515 = scalar_lea.vmem %s2, %s514
        // Predicated region
        $region33: #{tpu_custom_call.1} parent=27 // pred_check
          %p516 = pneg %p79
        $region34: #{tpu_custom_call.1} parent=27 // pred_check_branch
          %518 = sbr.rel (%p516) target = $region36
        $region35: #{tpu_custom_call.1} parent=27 // pred_region
          _
        $region36: #{tpu_custom_call.1} parent=27 // pred_fallthru
          _
      $region28: #{tpu_custom_call.1} parent=5 // pred_fallthru
        _
      %p519 = scmp.le.s32.totalorder 2, %s9
      // Predicated region
      $region37: #{tpu_custom_call.1} parent=5 // pred_check
        %p520 = pneg %p519
      $region38: #{tpu_custom_call.1} parent=5 // pred_check_branch
        %522 = sbr.rel (%p520) target = $region40
      $region39: #{tpu_custom_call.1} parent=5 // pred_region
        %s523 = ssub.s32 %s9, 2
        // Predicated region
        $region41: #{tpu_custom_call.1} parent=39 // pred_check
          %p524 = pneg %p85
        $region42: #{tpu_custom_call.1} parent=39 // pred_check_branch
          %526 = sbr.rel (%p524) target = $region44
        $region43: #{tpu_custom_call.1} parent=39 // pred_region
          %p527 = scmp.lt.s32.totalorder %s15, 1
          %s528 = scalar_select %p527, %s15, 1
          %s529 = smul.addr %s528, 8
          %s530 = scalar_lea.vmem %s2, %s529
        $region44: #{tpu_custom_call.1} parent=39 // pred_fallthru
          _
      $region40: #{tpu_custom_call.1} parent=5 // pred_fallthru
        _
    $region6: #{tpu_custom_call.1} parent=1 // loop_footer
      %s13 = sadd.s32 1, %s9
    $region7: #{tpu_custom_call.1} parent=1 // loop_footer_branch
      %8 = sbr.rel target = $region3
    $region8: #{tpu_custom_call.1} parent=1 // loop_exit
      _
    %531 = vsyncpa [#allocation3], 1
    %s532 = scalar_lea.sflag [#allocation3], 1
    %533 = vsyncpa %s532, 1

</llo_original>
